<compile_context>
chip_gen: v7x
topology: tpu7x:2x2x1
jax: 0.10.0
libtpu: 0.0.40
codegen_flags: <defaults>
</compile_context>

<pallas_src>
import functools

import jax
import jax.numpy as jnp
from jax.experimental import pallas as pl
from jax.experimental.pallas import tpu as pltpu


def _vmem_budget_bytes():
    """~75% of per-core VMEM (v5e/v6e: 128 MiB -> 96 MiB, v7x: 64 MiB -> 48 MiB)."""
    try:
        cap = int(pltpu.get_tpu_info().vmem_capacity_bytes)
    except Exception:
        cap = 64 * 1024 * 1024  # conservative default (v7x physical)
    return (cap * 3) // 4


def _sublane_align(dtype):
    """Sublane packing of the dtype: 8 for 32-bit, 16 for bf16, 32 for int8/fp8."""
    return max(8, 32 // jnp.dtype(dtype).itemsize)


def _pick_rows(hwv, cv, itemsize, *, target_bytes, align):
    """Largest spatial tile height under ~target_bytes.

    Returns (rows, ragged). rows is a multiple of 8 (Mosaic sublane rule)
    unless it equals hwv; multiples of `align` (dtype sublane packing) are
    preferred. If no suitable divisor of hwv fits under the cap, fall back to
    an aligned row count with a ragged (masked) last tile instead of a single
    full-hwv tile that might not fit VMEM.
    """
    max_rows = max(1, target_bytes // max(1, cv * itemsize))
    if hwv <= max_rows:
        return hwv, False
    best_pack, best8 = 0, 0
    d = 1
    while d * d <= hwv:
        if hwv % d == 0:
            for cand in (d, hwv // d):
                if cand <= max_rows and cand % 8 == 0:
                    if cand > best8:
                        best8 = cand
                    if cand % align == 0 and cand > best_pack:
                        best_pack = cand
        d += 1
    if best_pack:
        return best_pack, False
    if best8:
        return best8, False
    rows = max(align, (max_rows // align) * align)
    rows = min(rows, hwv)
    return rows, rows < hwv


def _fold_and_scale(per_lane_ss, gamma_row, eps, reps, chan):
    """per_lane_ss: (1, 1, Cv) f32 per-lane sum of squares -> scale (1, 1, Cv).

    Lane-dense view (Cv = 128, reps = 128 // C): channel c lives on lanes
    l with l % C == c, so summing all rotations of the per-lane sums by
    multiples of C yields the per-channel sum, already broadcast across its
    lanes. The lane mean of Gx then equals the channel mean (each channel
    appears `reps` times). Plain view: reps == 1, no rolls needed.
    """
    ss = per_lane_ss
    for k in range(1, reps):
        ss = ss + pltpu.roll(per_lane_ss, shift=k * chan, axis=2)
    gx = jnp.sqrt(ss)                                            # (1, 1, Cv)
    nx = gx / (jnp.mean(gx, axis=-1, keepdims=True) + eps)       # (1, 1, Cv)
    return gamma_row.astype(jnp.float32)[:, None, :] * nx + 1.0  # (1, 1, Cv)


def _grn_fused_kernel(x_ref, g_ref, b_ref, o_ref, *, eps, reps, chan):
    """One resident per-sample slab: stats + normalize + apply, read/write once."""
    xf = x_ref[...].astype(jnp.float32)                          # (1, HWv, Cv)
    per_lane = jnp.sum(xf * xf, axis=1, keepdims=True)           # (1, 1, Cv)
    scale = _fold_and_scale(per_lane, g_ref[...], eps, reps, chan)
    beta = b_ref[...].astype(jnp.float32)[:, None, :]            # (1, 1, Cv)
    o_ref[...] = (xf * scale + beta).astype(o_ref.dtype)


def _grn_stats_kernel(x_ref, g_ref, s_ref, *, eps, reps, chan, rows, hwv, ragged):
    """Fallback pass 1: accumulate sum(x^2), emit scale = gamma*Nx + 1 at the end."""
    t = pl.program_id(1)

    @pl.when(t == 0)
    def _():
        s_ref[...] = jnp.zeros_like(s_ref)

    xf = x_ref[...].astype(jnp.float32)                          # (1, rows, Cv)
    if ragged:
        valid = hwv - t * rows
        ridx = jax.lax.broadcasted_iota(jnp.int32, xf.shape, 1)
        xf = jnp.where(ridx < valid, xf, 0.0)
    s_ref[...] += jnp.sum(xf * xf, axis=1, keepdims=True)        # (1, 1, Cv)

    @pl.when(t == pl.num_programs(1) - 1)
    def _():
        s_ref[...] = _fold_and_scale(s_ref[...], g_ref[...], eps, reps, chan)


def _grn_apply_kernel(x_ref, s_ref, b_ref, o_ref):
    """Fallback pass 2: pure HBM-bound stream y = x * scale + beta."""
    xf = x_ref[...].astype(jnp.float32)
    beta = b_ref[...].astype(jnp.float32)[:, None, :]
    o_ref[...] = (xf * s_ref[...] + beta).astype(o_ref.dtype)


def grn(x, gamma, beta, *, eps=1e-6):
    """Pallas TPU GRN. x: (B, H, W, C); gamma/beta: (1, 1, 1, C)."""
    B, H, W, C = x.shape
    hw = H * W
    itemsize = jnp.dtype(x.dtype).itemsize
    budget = _vmem_budget_bytes()

    # Lane-dense view when the channel pattern repeats cleanly within 128 lanes.
    if C < 128 and 128 % C == 0 and (hw * C) % 128 == 0:
        reps = 128 // C
        cv = 128
        hwv = (hw * C) // 128
        g_row = jnp.tile(gamma.reshape(1, C).astype(jnp.float32), (1, reps))
        b_row = jnp.tile(beta.reshape(1, C).astype(jnp.float32), (1, reps))
    else:
        reps = 1
        cv = C
        hwv = hw
        g_row = gamma.reshape(1, C).astype(jnp.float32)
        b_row = beta.reshape(1, C).astype(jnp.float32)

    xv = x.reshape(B, hwv, cv)

    # ---- Fused single-pass path (primary): read x once, write y once. ----
    # Estimate: double-buffered in + out slabs plus f32 elementwise temporaries.
    fused_bytes = 4 * hwv * cv * itemsize + 2 * hwv * cv * 4 + (1 << 20)
    if fused_bytes <= budget:
        out = pl.pallas_call(
            functools.partial(_grn_fused_kernel, eps=float(eps), reps=reps, chan=C),
            out_shape=jax.ShapeDtypeStruct((B, hwv, cv), x.dtype),
            grid=(B,),
            in_specs=[
                pl.BlockSpec((1, hwv, cv), lambda b: (b, 0, 0)),
                pl.BlockSpec((1, cv), lambda b: (0, 0)),
                pl.BlockSpec((1, cv), lambda b: (0, 0)),
            ],
            out_specs=pl.BlockSpec((1, hwv, cv), lambda b: (b, 0, 0)),
            compiler_params=pltpu.CompilerParams(
                dimension_semantics=("parallel",),
                vmem_limit_bytes=int(budget)),
            cost_estimate=pl.CostEstimate(
                flops=5 * B * hw * C,
                transcendentals=B * C,
                bytes_accessed=2 * B * hw * C * itemsize + 2 * B * cv * 4),
        )(xv, g_row, b_row)
        return out.reshape(B, H, W, C)

    # ---- Two-pass fallback: sample slab does not fit VMEM. ----
    align = _sublane_align(x.dtype)
    # Pass 1 only double-buffers its input (output is a tiny resident (1,1,Cv)
    # accumulator), so it gets ~2x the per-tile budget of the apply pass.
    rows1, ragged1 = _pick_rows(hwv, cv, itemsize, target_bytes=budget // 5, align=align)
    rows2, _ = _pick_rows(hwv, cv, itemsize, target_bytes=budget // 8, align=align)
    nt1 = pl.cdiv(hwv, rows1)
    nt2 = pl.cdiv(hwv, rows2)

    # Pass 1: per-(sample, channel) sum of squares -> scale = gamma*Nx + 1.
    scale = pl.pallas_call(
        functools.partial(_grn_stats_kernel, eps=float(eps), reps=reps, chan=C,
                          rows=rows1, hwv=hwv, ragged=ragged1),
        out_shape=jax.ShapeDtypeStruct((B, 1, cv), jnp.float32),
        grid=(B, nt1),
        in_specs=[
            pl.BlockSpec((1, rows1, cv), lambda b, t: (b, t, 0)),
            pl.BlockSpec((1, cv), lambda b, t: (0, 0)),
        ],
        out_specs=pl.BlockSpec((1, 1, cv), lambda b, t: (b, 0, 0)),
        compiler_params=pltpu.CompilerParams(
            dimension_semantics=("parallel", "arbitrary"),
            vmem_limit_bytes=int(budget)),
        cost_estimate=pl.CostEstimate(
            flops=2 * B * hw * C,
            transcendentals=B * C,
            bytes_accessed=B * hw * C * itemsize + B * cv * 4),
    )(xv, g_row)

    # Pass 2: elementwise y = x * scale + beta (scale already includes Nx).
    out = pl.pallas_call(
        _grn_apply_kernel,
        out_shape=jax.ShapeDtypeStruct((B, hwv, cv), x.dtype),
        grid=(B, nt2),
        in_specs=[
            pl.BlockSpec((1, rows2, cv), lambda b, t: (b, t, 0)),
            pl.BlockSpec((1, 1, cv), lambda b, t: (b, 0, 0)),
            pl.BlockSpec((1, cv), lambda b, t: (0, 0)),
        ],
        out_specs=pl.BlockSpec((1, rows2, cv), lambda b, t: (b, t, 0)),
        compiler_params=pltpu.CompilerParams(
            dimension_semantics=("parallel", "parallel"),
            vmem_limit_bytes=int(budget)),
        cost_estimate=pl.CostEstimate(
            flops=2 * B * hw * C,
            transcendentals=0,
            bytes_accessed=2 * B * hw * C * itemsize + B * cv * 4),
    )(xv, scale, b_row)

    return out.reshape(B, H, W, C)


class GRN:
    """Mirror of the PyTorch GRN nn.Module (channels-last input (B, H, W, C))."""

    def __init__(self, dim):
        self.gamma = jnp.zeros((1, 1, 1, dim), dtype=jnp.float32)
        self.beta = jnp.zeros((1, 1, 1, dim), dtype=jnp.float32)

    def __call__(self, x):
        return grn(x, self.gamma, self.beta)


def _grn_ref(x, gamma, beta, eps=1e-6):
    xf = x.astype(jnp.float32)
    gx = jnp.sqrt(jnp.sum(xf * xf, axis=(1, 2), keepdims=True))       # (B,1,1,C)
    nx = gx / (jnp.mean(gx, axis=-1, keepdims=True) + eps)
    return (gamma * (xf * nx) + beta + xf).astype(x.dtype)


if __name__ == "__main__":
    key = jax.random.PRNGKey(0)
    kx, kg, kb = jax.random.split(key, 3)
    B, H, W, C = 2, 16, 16, 32
    x = jax.random.normal(kx, (B, H, W, C), dtype=jnp.float32)

    # Non-trivial gamma/beta so the normalization path is actually exercised.
    gamma = 0.1 * jax.random.normal(kg, (1, 1, 1, C), dtype=jnp.float32)
    beta = 0.1 * jax.random.normal(kb, (1, 1, 1, C), dtype=jnp.float32)

    mod = GRN(C)
    mod.gamma = gamma
    mod.beta = beta
    y = jax.block_until_ready(mod(x))

    y_ref = _grn_ref(x, gamma, beta)
    assert y.shape == x.shape and y.dtype == x.dtype
    assert jnp.allclose(y, y_ref, atol=1e-5, rtol=1e-5), "mismatch vs reference"

    # Default-initialized module (gamma = beta = 0) must reduce to identity,
    # exactly as the freshly-constructed PyTorch module does.
    mod0 = GRN(C)
    y0 = jax.block_until_ready(mod0(x))
    assert jnp.allclose(y0, x, atol=1e-5, rtol=1e-5)

    print("KERNEL_OK")
</pallas_src>

<mosaic_0001>
module attributes {stable_mosaic.version = 11 : i64} {
  func.func @_grn_fused_kernel(%arg0: i32, %arg1: memref<1x64x128xf32, #tpu.memory_space<vmem>>, %arg2: memref<1x128xf32, #tpu.memory_space<vmem>>, %arg3: memref<1x128xf32, #tpu.memory_space<vmem>>, %arg4: memref<1x64x128xf32, #tpu.memory_space<vmem>>) attributes {dimension_semantics = [#tpu.dimension_semantics<parallel>], iteration_bounds = array<i64: 2>, scalar_prefetch = 0 : i64, scratch_operands = 0 : i64, tpu.core_type = #tpu.core_type<tc>, window_params = [{transform_indices = @transform_0, window_bounds = array<i64: 1, 64, 128>}, {pipeline_mode = #tpu.pipeline_mode<synchronous>, transform_indices = @transform_1, window_bounds = array<i64: 1, 128>}, {pipeline_mode = #tpu.pipeline_mode<synchronous>, transform_indices = @transform_2, window_bounds = array<i64: 1, 128>}, {transform_indices = @transform_3, window_bounds = array<i64: 1, 64, 128>}]} {
    %c0 = arith.constant 0 : index
    %c0_0 = arith.constant 0 : index
    %c0_1 = arith.constant 0 : index
    %0 = vector.load %arg1[%c0, %c0_0, %c0_1] : memref<1x64x128xf32, #tpu.memory_space<vmem>>, vector<1x64x128xf32>
    %1 = arith.mulf %0, %0 : vector<1x64x128xf32>
    %cst = arith.constant dense<0.000000e+00> : vector<1x128xf32>
    %2 = vector.multi_reduction <add>, %1, %cst [1] : vector<1x64x128xf32> to vector<1x128xf32>
    %3 = vector.shape_cast %2 : vector<1x128xf32> to vector<1x1x128xf32>
    %c0_2 = arith.constant 0 : index
    %c0_3 = arith.constant 0 : index
    %4 = vector.load %arg2[%c0_2, %c0_3] : memref<1x128xf32, #tpu.memory_space<vmem>>, vector<1x128xf32>
    %c32_i32 = arith.constant 32 : i32
    %5 = tpu.dynamic_rotate %3 by %c32_i32 dim 2 : vector<1x1x128xf32>, i32 -> vector<1x1x128xf32>
    %6 = arith.addf %3, %5 : vector<1x1x128xf32>
    %c64_i32 = arith.constant 64 : i32
    %7 = tpu.dynamic_rotate %3 by %c64_i32 dim 2 : vector<1x1x128xf32>, i32 -> vector<1x1x128xf32>
    %8 = arith.addf %6, %7 : vector<1x1x128xf32>
    %c96_i32 = arith.constant 96 : i32
    %9 = tpu.dynamic_rotate %3 by %c96_i32 dim 2 : vector<1x1x128xf32>, i32 -> vector<1x1x128xf32>
    %10 = arith.addf %8, %9 : vector<1x1x128xf32>
    %11 = math.sqrt %10 : vector<1x1x128xf32>
    %cst_4 = arith.constant dense<0.000000e+00> : vector<1x1xf32>
    %12 = vector.multi_reduction <add>, %11, %cst_4 [2] : vector<1x1x128xf32> to vector<1x1xf32>
    %13 = vector.shape_cast %12 : vector<1x1xf32> to vector<1x1x1xf32>
    %cst_5 = arith.constant 1.280000e+02 : f32
    %14 = vector.broadcast %cst_5 : f32 to vector<1x1x1xf32>
    %15 = arith.divf %13, %14 : vector<1x1x1xf32>
    %cst_6 = arith.constant 9.99999997E-7 : f32
    %16 = vector.broadcast %cst_6 : f32 to vector<1x1x1xf32>
    %17 = arith.addf %15, %16 : vector<1x1x1xf32>
    %18 = vector.broadcast %17 : vector<1x1x1xf32> to vector<1x1x128xf32>
    %19 = arith.divf %11, %18 : vector<1x1x128xf32>
    %20 = vector.shape_cast %4 : vector<1x128xf32> to vector<1x1x128xf32>
    %21 = arith.mulf %20, %19 : vector<1x1x128xf32>
    %cst_7 = arith.constant 1.000000e+00 : f32
    %22 = vector.broadcast %cst_7 : f32 to vector<1x1x128xf32>
    %23 = arith.addf %21, %22 : vector<1x1x128xf32>
    %c0_8 = arith.constant 0 : index
    %c0_9 = arith.constant 0 : index
    %24 = vector.load %arg3[%c0_8, %c0_9] : memref<1x128xf32, #tpu.memory_space<vmem>>, vector<1x128xf32>
    %25 = vector.shape_cast %24 : vector<1x128xf32> to vector<1x1x128xf32>
    %26 = vector.broadcast %23 : vector<1x1x128xf32> to vector<1x64x128xf32>
    %27 = arith.mulf %0, %26 : vector<1x64x128xf32>
    %28 = vector.broadcast %25 : vector<1x1x128xf32> to vector<1x64x128xf32>
    %29 = arith.addf %27, %28 : vector<1x64x128xf32>
    %c0_10 = arith.constant 0 : index
    %c0_11 = arith.constant 0 : index
    %c0_12 = arith.constant 0 : index
    %30 = vector.load %arg4[%c0_10, %c0_11, %c0_12] : memref<1x64x128xf32, #tpu.memory_space<vmem>>, vector<1x64x128xf32>
    tpu.vector_store %arg4[%c0_10, %c0_11, %c0_12], %29 {strides = array<i32>} : memref<1x64x128xf32, #tpu.memory_space<vmem>>, vector<1x64x128xf32>,
    return
  }
  func.func @transform_0(%arg0: i32) -> (i32, i32, i32) {
    %c0_i32 = arith.constant 0 : i32
    %c0_i32_0 = arith.constant 0 : i32
    %c0_i32_1 = arith.constant 0 : i32
    return %arg0, %c0_i32, %c0_i32_0 : i32, i32, i32
  }
  func.func @transform_1(%arg0: i32) -> (i32, i32) {
    %c0_i32 = arith.constant 0 : i32
    %c0_i32_0 = arith.constant 0 : i32
    %c0_i32_1 = arith.constant 0 : i32
    return %c0_i32, %c0_i32_0 : i32, i32
  }
  func.func @transform_2(%arg0: i32) -> (i32, i32) {
    %c0_i32 = arith.constant 0 : i32
    %c0_i32_0 = arith.constant 0 : i32
    %c0_i32_1 = arith.constant 0 : i32
    return %c0_i32, %c0_i32_0 : i32, i32
  }
  func.func @transform_3(%arg0: i32) -> (i32, i32, i32) {
    %c0_i32 = arith.constant 0 : i32
    %c0_i32_0 = arith.constant 0 : i32
    %c0_i32_1 = arith.constant 0 : i32
    return %arg0, %c0_i32, %c0_i32_0 : i32, i32, i32
  }
}

</mosaic_0001>

<llo_original>
// kernel: tpu_custom_call.1
$region0: #{tpu_custom_call.1}
  #allocation0 [shape = 'u32[]', space=smem, size = 0x4, offset = 0x4, fixed_abs, tag = 'smem constant byte address 0x4 - core index']
  #allocation1 [shape = 'u32[144,128]{1,0:T(1,128)}', space=vmem, size = 0x12000, scoped, tag = 'internal scratch']
  %s0 = inlined_call_operand.hbm [shape: f32[2,64,128], index: 0, kind: input, shape index: {}]
  %s1 = inlined_call_operand.vmem [shape: f32[1,128], index: 1, kind: input, shape index: {}]
  %s2 = inlined_call_operand.vmem [shape: f32[1,128], index: 2, kind: input, shape index: {}]
  %s3 = inlined_call_operand.hbm [shape: f32[2,64,128], index: 3, kind: output, shape index: {}]
  %s4 = sld [smem:[#allocation0]]
  $region49: #{tpu_custom_call.1} parent=0
    _
  %s6 = ssub.s32 1, %s4
  %s7 = scalar_select 0, %s6, %s4
  $region1: #{tpu_custom_call.1} parent=0
    #allocation2 [shape = 'u8[65536]{0}', space=vmem, size = 0x10000, scoped, tag = 'input window, operand 0']
    #allocation3 [shape = 's32[2]{0}', space=sflag, size = 0x8, scoped, tag = 'scoped memory for tpu_custom_call.1']
    #allocation4 [shape = 's32[2]{0}', space=sflag, size = 0x8, scoped, tag = 'scoped memory for tpu_custom_call.1']
    #allocation5 [shape = 'u8[65536]{0}', space=vmem, size = 0x10000, scoped, tag = 'output window, operand 0']
    %8 = vsyncpa [#allocation3], 0
    %s9 = scalar_lea.sflag [#allocation3], 1
    %10 = vsyncpa %s9, 0
    %11 = vsyncpa [#allocation4], 0
    %s12 = scalar_lea.sflag [#allocation4], 1
    %13 = vsyncpa %s12, 0
    loop: start=0, step=1, limit=4
    $region2: #{tpu_custom_call.1} parent=1 // loop_pre_header
      _
    $region3: #{tpu_custom_call.1} parent=1 // loop_header
      %s15 = sphi 0, %s19
      %p16 = scmp.ge.s32.totalorder %s15, 4
      %s25 = sphi 0, %s27
      %s28 = sphi 0, %s25
      %s29 = sphi 0, %s28
      %s45 = sphi 0, %s29
      %s49 = sphi 0, %s49
      %s51 = sphi 0, %s49
      %s52 = sphi 0, %s51
      %s66 = sphi 0, %s52
      %s70 = sphi 0, %s70
      %s72 = sphi 0, %s70
      %s73 = sphi 0, %s72
      %s87 = sphi 0, %s73
      %s93 = sphi 0, %s95
      %s96 = sphi 0, %s93
      %s97 = sphi 0, %s96
      %s113 = sphi 0, %s97
    $region4: #{tpu_custom_call.1} parent=1 // loop_header_branch
      %18 = sbr.rel (%p16) target = $region8
    $region5: #{tpu_custom_call.1} parent=1 // loop_body
      %s20 = ssub.s32 %s15, 1
      %s21 = ssub.s32 %s15, 2
      %s22 = sadd.s32 %s15, 1
      %s23 = ssub.s32 %s15, %s22
      %p24 = scmp.eq.s32.totalorder %s23, 0
      %s26 = sadd.s32 %s25, 1
      %s27 = scalar_select %p24, %s25, %s26
      %p30 = pneg %p24
      %p31 = scmp.eq.s32.totalorder %s15, 1
      %p32 = por %p30, %p31
      %p33 = scmp.ne.s32.totalorder %s25, %s28
      %p34 = scmp.eq.s32.totalorder %s15, 0
      %p35 = por %p33, %p34
      %p36 = scmp.ne.s32.totalorder %s25, %s28
      %p37 = scmp.eq.s32.totalorder %s20, 1
      %p38 = por %p36, %p37
      %p39 = scmp.ne.s32.totalorder %s28, %s29
      %p40 = scmp.eq.s32.totalorder %s20, 0
      %p41 = por %p39, %p40
      %p42 = scmp.ne.s32.totalorder %s28, %s29
      %p43 = scmp.eq.s32.totalorder %s21, 1
      %p44 = por %p42, %p43
      %p46 = scmp.ne.s32.totalorder %s29, %s45
      %p47 = scmp.eq.s32.totalorder %s21, 0
      %p48 = por %p46, %p47
      %s50 = sadd.s32 %s49, 1
      %p53 = scmp.eq.s32.totalorder %s15, 1
      %p54 = scmp.ne.s32.totalorder %s49, %s51
      %p55 = scmp.eq.s32.totalorder %s15, 0
      %p56 = por %p54, %p55
      %p57 = scmp.ne.s32.totalorder %s49, %s51
      %p58 = scmp.eq.s32.totalorder %s20, 1
      %p59 = por %p57, %p58
      %p60 = scmp.ne.s32.totalorder %s51, %s52
      %p61 = scmp.eq.s32.totalorder %s20, 0
      %p62 = por %p60, %p61
      %p63 = scmp.ne.s32.totalorder %s51, %s52
      %p64 = scmp.eq.s32.totalorder %s21, 1
      %p65 = por %p63, %p64
      %p67 = scmp.ne.s32.totalorder %s52, %s66
      %p68 = scmp.eq.s32.totalorder %s21, 0
      %p69 = por %p67, %p68
      %s71 = sadd.s32 %s70, 1
      %p74 = scmp.eq.s32.totalorder %s15, 1
      %p75 = scmp.ne.s32.totalorder %s70, %s72
      %p76 = scmp.eq.s32.totalorder %s15, 0
      %p77 = por %p75, %p76
      %p78 = scmp.ne.s32.totalorder %s70, %s72
      %p79 = scmp.eq.s32.totalorder %s20, 1
      %p80 = por %p78, %p79
      %p81 = scmp.ne.s32.totalorder %s72, %s73
      %p82 = scmp.eq.s32.totalorder %s20, 0
      %p83 = por %p81, %p82
      %p84 = scmp.ne.s32.totalorder %s72, %s73
      %p85 = scmp.eq.s32.totalorder %s21, 1
      %p86 = por %p84, %p85
      %p88 = scmp.ne.s32.totalorder %s73, %s87
      %p89 = scmp.eq.s32.totalorder %s21, 0
      %p90 = por %p88, %p89
      %s91 = ssub.s32 %s15, %s22
      %p92 = scmp.eq.s32.totalorder %s91, 0
      %s94 = sadd.s32 %s93, 1
      %s95 = scalar_select %p92, %s93, %s94
      %p98 = pneg %p92
      %p99 = scmp.eq.s32.totalorder %s15, 1
      %p100 = por %p98, %p99
      %p101 = scmp.ne.s32.totalorder %s93, %s96
      %p102 = scmp.eq.s32.totalorder %s15, 0
      %p103 = por %p101, %p102
      %p104 = scmp.ne.s32.totalorder %s93, %s96
      %p105 = scmp.eq.s32.totalorder %s20, 1
      %p106 = por %p104, %p105
      %p107 = scmp.ne.s32.totalorder %s96, %s97
      %p108 = scmp.eq.s32.totalorder %s20, 0
      %p109 = por %p107, %p108
      %p110 = scmp.ne.s32.totalorder %s96, %s97
      %p111 = scmp.eq.s32.totalorder %s21, 1
      %p112 = por %p110, %p111
      %p114 = scmp.ne.s32.totalorder %s97, %s113
      %p115 = scmp.eq.s32.totalorder %s21, 0
      %p116 = por %p114, %p115
      %p117 = scmp.le.s32.totalorder 1, %s15
      %p118 = scmp.lt.s32.totalorder %s15, 3
      %p119 = pnand %p117, %p118
      %p120 = pneg %p119
      // Predicated region
      $region9: #{tpu_custom_call.1} parent=5 // pred_check
        _
      $region10: #{tpu_custom_call.1} parent=5 // pred_check_branch
        %122 = sbr.rel (%p119) target = $region12
      $region11: #{tpu_custom_call.1} parent=5 // pred_region
        %s123 = ssub.s32 %s15, 1
        // Predicated region
        $region13: #{tpu_custom_call.1} parent=11 // pred_check
          %p124 = pneg %p62
        $region14: #{tpu_custom_call.1} parent=11 // pred_check_branch
          %126 = sbr.rel (%p124) target = $region16
        $region15: #{tpu_custom_call.1} parent=11 // pred_region
          _
        $region16: #{tpu_custom_call.1} parent=11 // pred_fallthru
          _
        // Predicated region
        $region17: #{tpu_custom_call.1} parent=11 // pred_check
          %p127 = pneg %p83
        $region18: #{tpu_custom_call.1} parent=11 // pred_check_branch
          %129 = sbr.rel (%p127) target = $region20
        $region19: #{tpu_custom_call.1} parent=11 // pred_region
          _
        $region20: #{tpu_custom_call.1} parent=11 // pred_fallthru
          _
      $region12: #{tpu_custom_call.1} parent=5 // pred_fallthru
        _
      %p130 = scmp.lt.s32.totalorder %s15, 2
      // Predicated region
      $region21: #{tpu_custom_call.1} parent=5 // pred_check
        %p131 = pneg %p130
      $region22: #{tpu_custom_call.1} parent=5 // pred_check_branch
        %133 = sbr.rel (%p131) target = $region24
      $region23: #{tpu_custom_call.1} parent=5 // pred_region
        // Predicated region
        $region25: #{tpu_custom_call.1} parent=23 // pred_check
          %p134 = pneg %p35
        $region26: #{tpu_custom_call.1} parent=23 // pred_check_branch
          %136 = sbr.rel (%p134) target = $region28
        $region27: #{tpu_custom_call.1} parent=23 // pred_region
          %s137 = sand.u32 %s25, 1
          %s138 = scalar_lea.sflag [#allocation3], %s137
          %s139 = sand.u32 %s25, 1
          %s140 = smul.addr %s139, 64
          %s141 = scalar_lea.vmem [#allocation2], %s140
          %s143 = ssub.s32 1024, 1024
          %144 = vsyncadd %s138, %s143
          %s145 = smul.addr %s15, 8
          %s146 = smul.addr %s145, 128
          %s147 = scalar_lea.hbm %s0, %s146
          %s148 = sshll.u32 %s141, 4
          %s149 = int_to_ptr.vmem [resolvable:$true] %s148
          %154 = dma.hbm_to_vmem [thread:$0]  %s147, 1024, %s149, %s138, 128, 128, 8
        $region28: #{tpu_custom_call.1} parent=23 // pred_fallthru
          _
      $region24: #{tpu_custom_call.1} parent=5 // pred_fallthru
        _
      %p155 = scmp.le.s32.totalorder 1, %s15
      %p156 = scmp.lt.s32.totalorder %s15, 3
      %p157 = pnand %p155, %p156
      %p158 = pneg %p157
      // Predicated region
      $region29: #{tpu_custom_call.1} parent=5 // pred_check
        _
      $region30: #{tpu_custom_call.1} parent=5 // pred_check_branch
        %160 = sbr.rel (%p157) target = $region32
      $region31: #{tpu_custom_call.1} parent=5 // pred_region
        %s161 = ssub.s32 %s15, 1
        %s162 = sand.u32 %s28, 1
        %s163 = scalar_lea.sflag [#allocation3], %s162
        %s164 = sand.u32 %s28, 1
        %s165 = smul.addr %s164, 64
        %s166 = scalar_lea.vmem [#allocation2], %s165
        // Predicated region
        $region33: #{tpu_custom_call.1} parent=31 // pred_check
          %p167 = pneg %p41
        $region34: #{tpu_custom_call.1} parent=31 // pred_check_branch
          %169 = sbr.rel (%p167) target = $region36
        $region35: #{tpu_custom_call.1} parent=31 // pred_region
          %170 = dma.done %s163, 1024
        $region36: #{tpu_custom_call.1} parent=31 // pred_fallthru
          _
        %s171 = sand.u32 %s28, 1
        %s172 = scalar_lea.sflag [#allocation3], %s171
        %s173 = sand.u32 %s28, 1
        %s174 = smul.addr %s173, 64
        %s175 = scalar_lea.vmem [#allocation2], %s174
        %p176 = pneg %p41
        %p177 = pneg %p38
        %p178 = pneg %p62
        %p179 = pneg %p59
        %p180 = pneg %p83
        %p181 = pneg %p80
        %p182 = pneg %p109
        %p183 = pneg %p106
        %s184 = sand.u32 %s96, 1
        %s185 = scalar_lea.sflag [#allocation4], %s184
        %s186 = sand.u32 %s96, 1
        %s187 = smul.addr %s186, 64
        %s188 = scalar_lea.vmem [#allocation5], %s187
        %v189 = vld [vmem:[%s166] sm:$0xff]
        %v190 = vld [vmem:[%s166 + $0x8] sm:$0xff]
        %v191 = vld [vmem:[%s166 + $0x10] sm:$0xff]
        %v192 = vld [vmem:[%s166 + $0x18] sm:$0xff]
        %v193 = vld [vmem:[%s166 + $0x20] sm:$0xff]
        %v194 = vld [vmem:[%s166 + $0x28] sm:$0xff]
        %v195 = vld [vmem:[%s166 + $0x30] sm:$0xff]
        %v196 = vld [vmem:[%s166 + $0x38] sm:$0xff]
        %v197 = vmul.f32 %v189, %v189
        %v198 = vmul.f32 %v190, %v190
        %v199 = vmul.f32 %v191, %v191
        %v200 = vmul.f32 %v192, %v192
        %v201 = vmul.f32 %v193, %v193
        %v202 = vmul.f32 %v194, %v194
        %v203 = vmul.f32 %v195, %v195
        %v204 = vmul.f32 %v196, %v196
        %v205 = vadd.f32 %v197, %v198
        %v206 = vadd.f32 %v205, %v199
        %v207 = vadd.f32 %v206, %v200
        %v208 = vadd.f32 %v207, %v201
        %v209 = vadd.f32 %v208, %v202
        %v210 = vadd.f32 %v209, %v203
        %v211 = vadd.f32 %v210, %v204
        %v212 = vrot.slane %v211, 4
        %v213 = vadd.f32 %v211, %v212
        %v214 = vrot.slane %v213, 2
        %v215 = vadd.f32 %v213, %v214
        %v216 = vrot.slane %v215, 1
        %v217 = vadd.f32 %v215, %v216
        %v218 = vld [vmem:[%s1] sm:$0x1]
        %219 = vrot.lane.b32.xlu0 %v217, 32
        %v220 = vpop.permute.xlu0 %219
        %v221 = vadd.f32 %v217, %v220
        %222 = vrot.lane.b32.xlu0 %v217, 64
        %v223 = vpop.permute.xlu0 %222
        %v224 = vadd.f32 %v221, %v223
        %225 = vrot.lane.b32.xlu0 %v217, 96
        %v226 = vpop.permute.xlu0 %225
        %v227 = vadd.f32 %v224, %v226
        %v228 = vrsqrt.pop %v227
        %v229 = vmul.f32 %v227, %v228
        %vm230 = vcmp.eq.f32.partialorder %v227, inf
        %v231 = vsel %vm230, %v227, %v229
        %vm232 = vcmp.eq.f32.partialorder %v227, 0.0
        %v233 = vand.u32 %v227, 2147483648
        %v234 = vsel %vm232, %v233, %v231
        %vm235 = vcmask 1040384
        %v236 = vsel %vm235, %v234, 0.0
        %237 = vadd.xlane.f32.xlu0 %v236
        %v238 = vpop.xlane.xlu0 %237
        %v239 = vrcp.pop 128.0
        %v240 = vmul.f32 %v238, %v239
        %v241 = vadd.f32 %v240, 1e-06
        %v242 = vrcp.pop %v241
        %v243 = vmul.f32 %v234, %v242
        %v244 = vmul.f32 %v218, %v243
        %v245 = vadd.f32 %v244, 1.0
        %v246 = vld [vmem:[%s2] sm:$0x1]
        %v248 = vlaneseq
        %v249 = vshrl.u32 %v248, 7
        %v250 = vsub.s32 0, %v249
        %v251 = vrot.slane %v245, %v250
        %v253 = vmul.f32 %v189, %v251
        %v254 = vmul.f32 %v190, %v251
        %v255 = vmul.f32 %v191, %v251
        %v256 = vmul.f32 %v192, %v251
        %v257 = vmul.f32 %v193, %v251
        %v258 = vmul.f32 %v194, %v251
        %v259 = vmul.f32 %v195, %v251
        %v260 = vmul.f32 %v196, %v251
        %v262 = vlaneseq
        %v263 = vshrl.u32 %v262, 7
        %v264 = vsub.s32 0, %v263
        %v265 = vrot.slane %v246, %v264
        %v267 = vadd.f32 %v253, %v265
        %v268 = vadd.f32 %v254, %v265
        %v269 = vadd.f32 %v255, %v265
        %v270 = vadd.f32 %v256, %v265
        %v271 = vadd.f32 %v257, %v265
        %v272 = vadd.f32 %v258, %v265
        %v273 = vadd.f32 %v259, %v265
        %v274 = vadd.f32 %v260, %v265
        %275 = vst [vmem:[%s188] sm:$0xff] %v267
        %276 = vst [vmem:[%s188 + $0x8] sm:$0xff] %v268
        %277 = vst [vmem:[%s188 + $0x10] sm:$0xff] %v269
        %278 = vst [vmem:[%s188 + $0x18] sm:$0xff] %v270
        %279 = vst [vmem:[%s188 + $0x20] sm:$0xff] %v271
        %280 = vst [vmem:[%s188 + $0x28] sm:$0xff] %v272
        %281 = vst [vmem:[%s188 + $0x30] sm:$0xff] %v273
        %282 = vst [vmem:[%s188 + $0x38] sm:$0xff] %v274
        %s283 = sand.u32 %s96, 1
        %s284 = scalar_lea.sflag [#allocation4], %s283
        %s285 = sand.u32 %s96, 1
        %s286 = smul.addr %s285, 64
        %s287 = scalar_lea.vmem [#allocation5], %s286
        // Predicated region
        $region37: #{tpu_custom_call.1} parent=31 // pred_check
          %p288 = pneg %p106
        $region38: #{tpu_custom_call.1} parent=31 // pred_check_branch
          %290 = sbr.rel (%p288) target = $region40
        $region39: #{tpu_custom_call.1} parent=31 // pred_region
          %s292 = ssub.s32 1024, 1024
          %293 = vsyncadd %s284, %s292
          %s294 = smul.addr %s20, 8
          %s295 = smul.addr %s294, 128
          %s296 = scalar_lea.hbm %s3, %s295
          %s297 = sshll.u32 %s287, 4
          %s298 = int_to_ptr.vmem [resolvable:$true] %s297
          %303 = dma.vmem_to_hbm [thread:$0]  %s298, 1024, %s296, %s284, 128, 128, 8
        $region40: #{tpu_custom_call.1} parent=31 // pred_fallthru
          _
      $region32: #{tpu_custom_call.1} parent=5 // pred_fallthru
        _
      %p304 = scmp.le.s32.totalorder 2, %s15
      // Predicated region
      $region41: #{tpu_custom_call.1} parent=5 // pred_check
        %p305 = pneg %p304
      $region42: #{tpu_custom_call.1} parent=5 // pred_check_branch
        %307 = sbr.rel (%p305) target = $region44
      $region43: #{tpu_custom_call.1} parent=5 // pred_region
        %s308 = ssub.s32 %s15, 2
        // Predicated region
        $region45: #{tpu_custom_call.1} parent=43 // pred_check
          %p309 = pneg %p112
        $region46: #{tpu_custom_call.1} parent=43 // pred_check_branch
          %311 = sbr.rel (%p309) target = $region48
        $region47: #{tpu_custom_call.1} parent=43 // pred_region
          %s312 = sand.u32 %s97, 1
          %s313 = scalar_lea.sflag [#allocation4], %s312
          %s314 = sand.u32 %s97, 1
          %s315 = smul.addr %s314, 64
          %s316 = scalar_lea.vmem [#allocation5], %s315
          %317 = dma.done %s313, 1024
        $region48: #{tpu_custom_call.1} parent=43 // pred_fallthru
          _
      $region44: #{tpu_custom_call.1} parent=5 // pred_fallthru
        _
    $region6: #{tpu_custom_call.1} parent=1 // loop_footer
      %s19 = sadd.s32 1, %s15
    $region7: #{tpu_custom_call.1} parent=1 // loop_footer_branch
      %14 = sbr.rel target = $region3
    $region8: #{tpu_custom_call.1} parent=1 // loop_exit
      _
    %318 = vsyncpa [#allocation3], 1
    %s319 = scalar_lea.sflag [#allocation3], 1
    %320 = vsyncpa %s319, 1
    %321 = vsyncpa [#allocation4], 1
    %s322 = scalar_lea.sflag [#allocation4], 1
    %323 = vsyncpa %s322, 1

</llo_original>
